<compile_context>
chip_gen: v6e
topology: v6e:2x2x1
jax: 0.10.0
libtpu: 0.0.40
codegen_flags: <defaults>
</compile_context>

<pallas_src>
import jax
import jax.numpy as jnp
from jax.experimental import pallas as pl
from jax.experimental.pallas import tpu as pltpu

_HID = 50  # hidden width of the posterior-drift MLP (hard-coded in the PyTorch module)

PACKED_PARAM_NAMES = (
    # hazard1 = GRU(N+1, G1): gates fused [r | z | n] along the output dim
    "w_i1_x", "w_i1_t", "w_h1", "b_i1", "b_h1",
    # hazard2 = GRU(G1, G2): gates fused
    "w_i2", "w_h2", "b_i2", "b_h2",
    # hazard_out = ELU -> Linear(G2, 1)
    "w_out", "b_out",
    # g = Linear(N+1+C, 50) -> ELU -> Linear(50, N); first weight split x / t / context
    "wg1_x", "wg1_t", "wg1_c", "bg1", "wg2", "bg2",
    # sigma_nn = Linear(N, N) -> ELU -> Linear(N, N) -> Sigmoid
    "ws1", "bs1", "ws2", "bs2",
)


def _round_up(a, m):
    return ((a + m - 1) // m) * m


def _elu(v):
    # PyTorch ELU (alpha=1.0); exp() guarded so the inactive branch never overflows.
    return jnp.where(v > 0.0, v, jnp.exp(jnp.minimum(v, 0.0)) - 1.0)


def _layout(N, C, G1, G2):
    """Static lane layouts for the packed activation slab, fused weights, and output."""
    lay = dict(
        N=N, C=C, G1=G1, G2=G2,
        # activation slab columns (stage-1 contraction axis): [x | t | ctx | h1 | h2 | 0]
        ox=0, ot=N, oc=N + 1, oh1=N + 1 + C, oh2=N + 1 + C + G1,
        K1u=N + 1 + C + G1 + G2,
        # stage-1 fused output columns: [gi1 | gh1 | gh2 | hid_pre | shid_pre | 0]
        c_gi1=0, c_gh1=3 * G1, c_gh2=6 * G1,
        c_hid=6 * G1 + 3 * G2, c_sh=6 * G1 + 3 * G2 + _HID,
        M1u=6 * G1 + 3 * G2 + _HID + N,
        # stage-2 block-diagonal weight: rows = [h1' | hid | s_hid], cols = [gi2 | dx | sg]
        r_h1=0, r_hid=G1, r_sh=G1 + _HID, K2=G1 + _HID + N,
        d_gi2=0, d_dx=3 * G2, d_sg=3 * G2 + N,
        M2u=3 * G2 + 2 * N,
        # packed output slab columns: [dx | sigma | h1' | h2' | log_Gamma | log_dS | 0]
        o_dx=0, o_sg=N, o_h1=2 * N, o_h2=2 * N + G1,
        o_lg=2 * N + G1 + G2, o_ls=2 * N + G1 + G2 + 1,
        OUTu=2 * N + G1 + G2 + 2,
    )
    lay["K1"] = _round_up(lay["K1u"], 128)
    lay["M1"] = _round_up(lay["M1u"], 128)
    lay["M2"] = _round_up(lay["M2u"], 128)
    lay["OUT"] = _round_up(lay["OUTu"], 128)
    return lay


def init_params(key, N, context_size, gamma_size):
    """Deterministic synthetic parameters (PyTorch-like uniform fan init), gate-packed."""
    G1, G2, C = gamma_size, gamma_size - 15, context_size
    keys = iter(jax.random.split(key, len(PACKED_PARAM_NAMES)))

    def u(shape, fan):
        k = float(fan) ** -0.5
        return jax.random.uniform(next(keys), shape, jnp.float32, -k, k)

    spec = {
        "w_i1_x": ((N, 3 * G1), G1), "w_i1_t": ((1, 3 * G1), G1),
        "w_h1": ((G1, 3 * G1), G1),
        "b_i1": ((1, 3 * G1), G1), "b_h1": ((1, 3 * G1), G1),
        "w_i2": ((G1, 3 * G2), G2), "w_h2": ((G2, 3 * G2), G2),
        "b_i2": ((1, 3 * G2), G2), "b_h2": ((1, 3 * G2), G2),
        "w_out": ((G2, 1), G2), "b_out": ((1, 1), G2),
        "wg1_x": ((N, _HID), N + 1 + C), "wg1_t": ((1, _HID), N + 1 + C),
        "wg1_c": ((C, _HID), N + 1 + C), "bg1": ((1, _HID), N + 1 + C),
        "wg2": ((_HID, N), _HID), "bg2": ((1, N), _HID),
        "ws1": ((N, N), N), "bs1": ((1, N), N),
        "ws2": ((N, N), N), "bs2": ((1, N), N),
    }
    return {name: u(*spec[name]) for name in PACKED_PARAM_NAMES}


def pack_params(params, N, context_size, gamma_size):
    """Pack the 21 per-layer tensors into 4 lane-dense slabs consumed by the kernel."""
    G1, G2, C = gamma_size, gamma_size - 15, context_size
    lay = _layout(N, C, G1, G2)
    K1, M1, K2, M2 = lay["K1"], lay["M1"], lay["K2"], lay["M2"]
    f32 = lambda a: jnp.asarray(a, jnp.float32)

    # --- stage-1 fused weight: rows follow the activation slab, cols the stage-1 layout
    w1 = jnp.zeros((K1, M1), jnp.float32)
    w1 = w1.at[lay["ox"]:lay["ox"] + N, lay["c_gi1"]:lay["c_gi1"] + 3 * G1].set(f32(params["w_i1_x"]))
    w1 = w1.at[lay["ot"]:lay["ot"] + 1, lay["c_gi1"]:lay["c_gi1"] + 3 * G1].set(f32(params["w_i1_t"]))
    w1 = w1.at[lay["oh1"]:lay["oh1"] + G1, lay["c_gh1"]:lay["c_gh1"] + 3 * G1].set(f32(params["w_h1"]))
    w1 = w1.at[lay["oh2"]:lay["oh2"] + G2, lay["c_gh2"]:lay["c_gh2"] + 3 * G2].set(f32(params["w_h2"]))
    w1 = w1.at[lay["ox"]:lay["ox"] + N, lay["c_hid"]:lay["c_hid"] + _HID].set(f32(params["wg1_x"]))
    w1 = w1.at[lay["ot"]:lay["ot"] + 1, lay["c_hid"]:lay["c_hid"] + _HID].set(f32(params["wg1_t"]))
    w1 = w1.at[lay["oc"]:lay["oc"] + C, lay["c_hid"]:lay["c_hid"] + _HID].set(f32(params["wg1_c"]))
    w1 = w1.at[lay["ox"]:lay["ox"] + N, lay["c_sh"]:lay["c_sh"] + N].set(f32(params["ws1"]))

    # --- stage-2 block-diagonal weight
    w2 = jnp.zeros((K2, M2), jnp.float32)
    w2 = w2.at[lay["r_h1"]:lay["r_h1"] + G1, lay["d_gi2"]:lay["d_gi2"] + 3 * G2].set(f32(params["w_i2"]))
    w2 = w2.at[lay["r_hid"]:lay["r_hid"] + _HID, lay["d_dx"]:lay["d_dx"] + N].set(f32(params["wg2"]))
    w2 = w2.at[lay["r_sh"]:lay["r_sh"] + N, lay["d_sg"]:lay["d_sg"] + N].set(f32(params["ws2"]))

    # --- one bias tile: row 0 = stage-1 biases, row 1 = stage-2 biases, row 2[0] = b_out
    bias = jnp.zeros((8, M1), jnp.float32)
    bias = bias.at[0, lay["c_gi1"]:lay["c_gi1"] + 3 * G1].set(f32(params["b_i1"][0]))
    bias = bias.at[0, lay["c_gh1"]:lay["c_gh1"] + 3 * G1].set(f32(params["b_h1"][0]))
    bias = bias.at[0, lay["c_gh2"]:lay["c_gh2"] + 3 * G2].set(f32(params["b_h2"][0]))
    bias = bias.at[0, lay["c_hid"]:lay["c_hid"] + _HID].set(f32(params["bg1"][0]))
    bias = bias.at[0, lay["c_sh"]:lay["c_sh"] + N].set(f32(params["bs1"][0]))
    bias = bias.at[1, lay["d_gi2"]:lay["d_gi2"] + 3 * G2].set(f32(params["b_i2"][0]))
    bias = bias.at[1, lay["d_dx"]:lay["d_dx"] + N].set(f32(params["bg2"][0]))
    bias = bias.at[1, lay["d_sg"]:lay["d_sg"] + N].set(f32(params["bs2"][0]))
    bias = bias.at[2, 0].set(f32(params["b_out"])[0, 0])

    return {"w1": w1, "w2": w2, "bias": bias, "w_out": f32(params["w_out"])}


def _make_kernel(lay, mm_dtype):
    N, G1, G2 = lay["N"], lay["G1"], lay["G2"]
    oh1, oh2 = lay["oh1"], lay["oh2"]
    c_gi1, c_gh1, c_gh2 = lay["c_gi1"], lay["c_gh1"], lay["c_gh2"]
    c_hid, c_sh = lay["c_hid"], lay["c_sh"]
    d_gi2, d_dx, d_sg = lay["d_gi2"], lay["d_dx"], lay["d_sg"]
    M2 = lay["M2"]
    o_dx, o_sg, o_h1, o_h2 = lay["o_dx"], lay["o_sg"], lay["o_h1"], lay["o_h2"]
    o_lg, o_ls = lay["o_lg"], lay["o_ls"]
    sig = jax.nn.sigmoid  # lax.logistic: EUP path, cheaper than exp + f32 divide on VALU

    def mm(xv, wv):
        return jnp.dot(xv.astype(mm_dtype), wv.astype(mm_dtype),
                       preferred_element_type=jnp.float32)

    def kernel(a_ref, w1_ref, w2_ref, bias_ref, wout_ref, out_ref):
        a = a_ref[...]                                     # (Tb, K1) [x|t_norm|ctx|h1|h2|0]
        h1 = a[:, oh1:oh1 + G1]
        h2 = a[:, oh2:oh2 + G2]

        # ---- stage 1: ONE (Tb,K1)x(K1,M1) GEMM for every input-only matmul ----
        s1 = mm(a, w1_ref[...]) + bias_ref[0:1, :]         # (Tb, M1)
        gi1 = s1[:, c_gi1:c_gi1 + 3 * G1]                  # GRU1 input gates
        gh1 = s1[:, c_gh1:c_gh1 + 3 * G1]                  # GRU1 hidden gates
        gh2 = s1[:, c_gh2:c_gh2 + 3 * G2]                  # GRU2 hidden gates
        hid = _elu(s1[:, c_hid:c_hid + _HID])              # g-MLP hidden
        s_hid = _elu(s1[:, c_sh:c_sh + N])                 # sigma_nn hidden

        # ---- GRU-1 gate math ([r|z|n] packing) ----
        r1 = sig(gi1[:, 0:G1] + gh1[:, 0:G1])
        z1 = sig(gi1[:, G1:2 * G1] + gh1[:, G1:2 * G1])
        n1 = jnp.tanh(gi1[:, 2 * G1:3 * G1] + r1 * gh1[:, 2 * G1:3 * G1])
        h1_new = (1.0 - z1) * n1 + z1 * h1                 # (Tb, G1)

        # ---- stage 2: block-diagonal GEMM on [h1' | hid | s_hid] ----
        lhs2 = jnp.concatenate([h1_new, hid, s_hid], axis=-1)   # (Tb, K2)
        s2 = mm(lhs2, w2_ref[...]) + bias_ref[1:2, 0:M2]        # (Tb, M2)
        gi2 = s2[:, d_gi2:d_gi2 + 3 * G2]
        dx = s2[:, d_dx:d_dx + N]
        sigma = sig(s2[:, d_sg:d_sg + N]) + 1e-5

        # ---- GRU-2 gate math ----
        r2 = sig(gi2[:, 0:G2] + gh2[:, 0:G2])
        z2 = sig(gi2[:, G2:2 * G2] + gh2[:, G2:2 * G2])
        n2 = jnp.tanh(gi2[:, 2 * G2:3 * G2] + r2 * gh2[:, 2 * G2:3 * G2])
        h2_new = (1.0 - z2) * n2 + z2 * h2                 # (Tb, G2)

        # ---- stage 3: hazard_out (tiny; depends on h2', cannot fuse into stage 2) ----
        log_gamma = mm(_elu(h2_new), wout_ref[...]) + bias_ref[2:3, 0:1]   # (Tb, 1)
        log_ds = -jnp.exp(log_gamma)                                        # (Tb, 1)

        # ---- direct lane sub-range stores into the 128-wide output slab ----
        out_ref[:, o_dx:o_dx + N] = dx
        out_ref[:, o_sg:o_sg + N] = sigma
        out_ref[:, o_h1:o_h1 + G1] = h1_new
        out_ref[:, o_h2:o_h2 + G2] = h2_new
        out_ref[:, o_lg:o_lg + 1] = log_gamma
        out_ref[:, o_ls:o_ls + 1] = log_ds
        # pad lanes are never written; the wrapper slices them off.

    return kernel


def _pick_tiling(B, tile_b):
    """Rows per tile and grid length; >=2 (even) grid steps for v7x's 2 TCs when B allows."""
    if B <= 16:
        return B, 1
    tb = min(tile_b, _round_up(pl.cdiv(B, 2), 8))
    g = pl.cdiv(B, tb)
    if g > 1 and g % 2:
        g += 1
        tb = _round_up(pl.cdiv(B, g), 8)
        g = pl.cdiv(B, tb)
    return tb, g


def sde_forward(packed, x, h, t, context, mean_T, std_T, *,
                tile_b=1024, matmul_dtype=jnp.float32):
    """Pallas-backed forward: returns (dx, log_dS, log_Gamma, (h1, h2), sigma_x)."""
    B, N = x.shape
    h1 = h[0].reshape(B, -1).astype(jnp.float32)          # (B, G1)
    h2 = h[1].reshape(B, -1).astype(jnp.float32)          # (B, G2)
    G1, G2 = h1.shape[-1], h2.shape[-1]
    C = context.shape[-1]
    lay = _layout(N, C, G1, G2)
    K1, M1, K2, M2, OUT = lay["K1"], lay["M1"], lay["K2"], lay["M2"], lay["OUT"]
    assert packed["w1"].shape == (K1, M1), (packed["w1"].shape, (K1, M1))
    assert packed["w2"].shape == (K2, M2), (packed["w2"].shape, (K2, M2))

    tb, grid_n = _pick_tiling(B, tile_b)
    Bp = tb * grid_n

    # Lane-dense activation slab [x | t_norm | ctx | h1 | h2 | 0]: one DMA per grid step.
    t_norm = (t.reshape(B, 1).astype(jnp.float32) - mean_T) / std_T
    slab = jnp.concatenate(
        [x.astype(jnp.float32), t_norm, context.astype(jnp.float32), h1, h2], axis=-1)
    slab = jnp.pad(slab, ((0, Bp - B), (0, K1 - lay["K1u"])))

    kernel = _make_kernel(lay, matmul_dtype)

    act_spec = pl.BlockSpec((tb, K1), lambda i: (i, 0))
    res_spec = lambda shp: pl.BlockSpec(shp, lambda i: (0, 0))   # resident across grid

    out = pl.pallas_call(
        kernel,
        grid=(grid_n,),
        out_shape=jax.ShapeDtypeStruct((Bp, OUT), jnp.float32),
        in_specs=[act_spec,
                  res_spec(packed["w1"].shape),
                  res_spec(packed["w2"].shape),
                  res_spec(packed["bias"].shape),
                  res_spec(packed["w_out"].shape)],
        out_specs=pl.BlockSpec((tb, OUT), lambda i: (i, 0)),
        compiler_params=pltpu.CompilerParams(
            dimension_semantics=("parallel",),
            vmem_limit_bytes=32 * 1024 * 1024),
    )(slab, packed["w1"], packed["w2"], packed["bias"], packed["w_out"])

    out = out[:B]
    dx = out[:, lay["o_dx"]:lay["o_dx"] + N]
    sigma = out[:, lay["o_sg"]:lay["o_sg"] + N]
    h1n = out[:, lay["o_h1"]:lay["o_h1"] + G1]
    h2n = out[:, lay["o_h2"]:lay["o_h2"] + G2]
    log_gamma = out[:, lay["o_lg"]:lay["o_lg"] + 1]
    log_ds = out[:, lay["o_ls"]]

    return dx, log_ds, log_gamma, (h1n[None, ...], h2n[None, ...]), sigma


def ref_forward(params, x, h, t, context, mean_T, std_T):
    """Pure-JAX mirror of the PyTorch forward (explicit concatenation, exact GRU math)."""
    sig = lambda v: 1.0 / (1.0 + jnp.exp(-v))
    elu = lambda v: jnp.where(v > 0.0, v, jnp.exp(jnp.minimum(v, 0.0)) - 1.0)

    B = x.shape[0]
    tn = (t.reshape(B, 1) - mean_T) / std_T
    xt = jnp.concatenate([x, tn], axis=-1)
    xz = jnp.concatenate([x, tn, context], axis=-1)
    h1, h2 = h[0][0], h[1][0]
    G1, G2 = h1.shape[-1], h2.shape[-1]

    W_i1 = jnp.concatenate([params["w_i1_x"], params["w_i1_t"]], axis=0)
    gi1 = xt @ W_i1 + params["b_i1"]
    gh1 = h1 @ params["w_h1"] + params["b_h1"]
    r1 = sig(gi1[:, :G1] + gh1[:, :G1])
    z1 = sig(gi1[:, G1:2 * G1] + gh1[:, G1:2 * G1])
    n1 = jnp.tanh(gi1[:, 2 * G1:] + r1 * gh1[:, 2 * G1:])
    h1n = (1.0 - z1) * n1 + z1 * h1

    gi2 = h1n @ params["w_i2"] + params["b_i2"]
    gh2 = h2 @ params["w_h2"] + params["b_h2"]
    r2 = sig(gi2[:, :G2] + gh2[:, :G2])
    z2 = sig(gi2[:, G2:2 * G2] + gh2[:, G2:2 * G2])
    n2 = jnp.tanh(gi2[:, 2 * G2:] + r2 * gh2[:, 2 * G2:])
    h2n = (1.0 - z2) * n2 + z2 * h2

    log_gamma = elu(h2n) @ params["w_out"] + params["b_out"]

    wg1 = jnp.concatenate([params["wg1_x"], params["wg1_t"], params["wg1_c"]], axis=0)
    dx = elu(xz @ wg1 + params["bg1"]) @ params["wg2"] + params["bg2"]

    sigma = sig(elu(x @ params["ws1"] + params["bs1"]) @ params["ws2"] + params["bs2"]) + 1e-5

    return dx, -jnp.exp(log_gamma).reshape(B), log_gamma, (h1n[None, ...], h2n[None, ...]), sigma


def _check(out, ref):
    for a, b in zip(jax.tree_util.tree_leaves(out), jax.tree_util.tree_leaves(ref)):
        assert a.shape == b.shape, (a.shape, b.shape)
        assert jnp.allclose(a, b, rtol=2e-3, atol=2e-3), (a, b)


if __name__ == "__main__":
    N, C, G = 8, 4, 32               # N, context_size, gamma_size (G2 = G - 15 = 17)
    mean_T, std_T = 40.0, 10.0

    key = jax.random.PRNGKey(0)
    kp, kx, kt, kc, kh1, kh2 = jax.random.split(key, 6)
    params = init_params(kp, N, C, G)
    packed = pack_params(params, N, C, G)    # done once; reused across forward calls

    # --- small-batch case (single grid step, blocks == full arrays) ---
    B = 2
    x = jax.random.normal(kx, (B, N), jnp.float32)
    t = jax.random.uniform(kt, (B,), jnp.float32, 20.0, 80.0)
    context = jax.random.normal(kc, (B, C), jnp.float32)
    h = (jax.random.normal(kh1, (1, B, G), jnp.float32),
         jax.random.normal(kh2, (1, B, G - 15), jnp.float32))

    out = sde_forward(packed, x, h, t, context, mean_T, std_T)
    out = jax.block_until_ready(out)
    _check(out, ref_forward(params, x, h, t, context, mean_T, std_T))

    # --- larger batch exercising the tiled "parallel" 2-step grid path (with padding) ---
    B2 = 300
    x2 = jax.random.normal(kx, (B2, N), jnp.float32)
    t2 = jax.random.uniform(kt, (B2,), jnp.float32, 20.0, 80.0)
    c2 = jax.random.normal(kc, (B2, C), jnp.float32)
    h2 = (jax.random.normal(kh1, (1, B2, G), jnp.float32),
          jax.random.normal(kh2, (1, B2, G - 15), jnp.float32))

    out2 = sde_forward(packed, x2, h2, t2, c2, mean_T, std_T)
    out2 = jax.block_until_ready(out2)
    _check(out2, ref_forward(params, x2, h2, t2, c2, mean_T, std_T))

    print("KERNEL_OK")
</pallas_src>

<mosaic_0001>
module attributes {stable_mosaic.version = 11 : i64} {
  func.func @kernel(%arg0: i32, %arg1: memref<2x128xf32, #tpu.memory_space<vmem>>, %arg2: memref<128x384xf32, #tpu.memory_space<vmem>>, %arg3: memref<90x128xf32, #tpu.memory_space<vmem>>, %arg4: memref<8x384xf32, #tpu.memory_space<vmem>>, %arg5: memref<17x1xf32, #tpu.memory_space<vmem>>, %arg6: memref<2x128xf32, #tpu.memory_space<vmem>>) attributes {dimension_semantics = [#tpu.dimension_semantics<parallel>], iteration_bounds = array<i64: 1>, scalar_prefetch = 0 : i64, scratch_operands = 0 : i64, tpu.core_type = #tpu.core_type<tc>, window_params = [{transform_indices = @transform_0, window_bounds = array<i64: 2, 128>}, {pipeline_mode = #tpu.pipeline_mode<synchronous>, transform_indices = @transform_1, window_bounds = array<i64: 128, 384>}, {pipeline_mode = #tpu.pipeline_mode<synchronous>, transform_indices = @transform_2, window_bounds = array<i64: 90, 128>}, {pipeline_mode = #tpu.pipeline_mode<synchronous>, transform_indices = @transform_3, window_bounds = array<i64: 8, 384>}, {pipeline_mode = #tpu.pipeline_mode<synchronous>, transform_indices = @transform_4, window_bounds = array<i64: 17, 1>}, {transform_indices = @transform_5, window_bounds = array<i64: 2, 128>}]} {
    %c0 = arith.constant 0 : index
    %c0_0 = arith.constant 0 : index
    %0 = vector.load %arg1[%c0, %c0_0] : memref<2x128xf32, #tpu.memory_space<vmem>>, vector<2x128xf32>
    %1 = vector.extract_strided_slice %0 {offsets = [0, 13], sizes = [2, 32], strides = [1, 1]} : vector<2x128xf32> to vector<2x32xf32>
    %2 = vector.extract_strided_slice %0 {offsets = [0, 45], sizes = [2, 17], strides = [1, 1]} : vector<2x128xf32> to vector<2x17xf32>
    %c0_1 = arith.constant 0 : index
    %c0_2 = arith.constant 0 : index
    %3 = vector.load %arg2[%c0_1, %c0_2] : memref<128x384xf32, #tpu.memory_space<vmem>>, vector<128x384xf32>
    %cst = arith.constant dense<0.000000e+00> : vector<2x384xf32>
    %4 = tpu.matmul %0, %3, %cst {dimension_numbers = #tpu.dot_dimension_numbers<[1], [0], [0], [1], [0, 0, 1, 1], [], []>} : vector<2x128xf32>, vector<128x384xf32>, vector<2x384xf32> -> vector<2x384xf32>
    %c0_3 = arith.constant 0 : index
    %c0_4 = arith.constant 0 : index
    %5 = vector.load %arg4[%c0_3, %c0_4] : memref<8x384xf32, #tpu.memory_space<vmem>>, vector<1x384xf32>
    %6 = vector.broadcast %5 : vector<1x384xf32> to vector<2x384xf32>
    %7 = arith.addf %4, %6 : vector<2x384xf32>
    %8 = vector.extract_strided_slice %7 {offsets = [0, 0], sizes = [2, 96], strides = [1, 1]} : vector<2x384xf32> to vector<2x96xf32>
    %9 = vector.extract_strided_slice %7 {offsets = [0, 96], sizes = [2, 96], strides = [1, 1]} : vector<2x384xf32> to vector<2x96xf32>
    %10 = vector.extract_strided_slice %7 {offsets = [0, 192], sizes = [2, 51], strides = [1, 1]} : vector<2x384xf32> to vector<2x51xf32>
    %11 = vector.extract_strided_slice %7 {offsets = [0, 243], sizes = [2, 50], strides = [1, 1]} : vector<2x384xf32> to vector<2x50xf32>
    %cst_5 = arith.constant 0.000000e+00 : f32
    %12 = vector.broadcast %cst_5 : f32 to vector<2x50xf32>
    %13 = arith.cmpf ogt, %11, %12 : vector<2x50xf32>
    %cst_6 = arith.constant 0.000000e+00 : f32
    %14 = vector.broadcast %cst_6 : f32 to vector<2x50xf32>
    %15 = arith.minimumf %11, %14 : vector<2x50xf32>
    %16 = math.exp %15 : vector<2x50xf32>
    %cst_7 = arith.constant 1.000000e+00 : f32
    %17 = vector.broadcast %cst_7 : f32 to vector<2x50xf32>
    %18 = arith.subf %16, %17 : vector<2x50xf32>
    %19 = arith.select %13, %11, %18 : vector<2x50xi1>, vector<2x50xf32>
    %20 = vector.extract_strided_slice %7 {offsets = [0, 293], sizes = [2, 8], strides = [1, 1]} : vector<2x384xf32> to vector<2x8xf32>
    %cst_8 = arith.constant 0.000000e+00 : f32
    %21 = vector.broadcast %cst_8 : f32 to vector<2x8xf32>
    %22 = arith.cmpf ogt, %20, %21 : vector<2x8xf32>
    %cst_9 = arith.constant 0.000000e+00 : f32
    %23 = vector.broadcast %cst_9 : f32 to vector<2x8xf32>
    %24 = arith.minimumf %20, %23 : vector<2x8xf32>
    %25 = math.exp %24 : vector<2x8xf32>
    %cst_10 = arith.constant 1.000000e+00 : f32
    %26 = vector.broadcast %cst_10 : f32 to vector<2x8xf32>
    %27 = arith.subf %25, %26 : vector<2x8xf32>
    %28 = arith.select %22, %20, %27 : vector<2x8xi1>, vector<2x8xf32>
    %29 = vector.extract_strided_slice %8 {offsets = [0, 0], sizes = [2, 32], strides = [1, 1]} : vector<2x96xf32> to vector<2x32xf32>
    %30 = vector.extract_strided_slice %9 {offsets = [0, 0], sizes = [2, 32], strides = [1, 1]} : vector<2x96xf32> to vector<2x32xf32>
    %31 = arith.addf %29, %30 : vector<2x32xf32>
    %32 = arith.negf %31 : vector<2x32xf32>
    %33 = math.exp %32 : vector<2x32xf32>
    %cst_11 = arith.constant 1.000000e+00 : f32
    %34 = vector.broadcast %cst_11 : f32 to vector<2x32xf32>
    %35 = arith.addf %34, %33 : vector<2x32xf32>
    %36 = arith.divf %34, %35 : vector<2x32xf32>
    %37 = vector.extract_strided_slice %8 {offsets = [0, 32], sizes = [2, 32], strides = [1, 1]} : vector<2x96xf32> to vector<2x32xf32>
    %38 = vector.extract_strided_slice %9 {offsets = [0, 32], sizes = [2, 32], strides = [1, 1]} : vector<2x96xf32> to vector<2x32xf32>
    %39 = arith.addf %37, %38 : vector<2x32xf32>
    %40 = arith.negf %39 : vector<2x32xf32>
    %41 = math.exp %40 : vector<2x32xf32>
    %cst_12 = arith.constant 1.000000e+00 : f32
    %42 = vector.broadcast %cst_12 : f32 to vector<2x32xf32>
    %43 = arith.addf %42, %41 : vector<2x32xf32>
    %44 = arith.divf %42, %43 : vector<2x32xf32>
    %45 = vector.extract_strided_slice %8 {offsets = [0, 64], sizes = [2, 32], strides = [1, 1]} : vector<2x96xf32> to vector<2x32xf32>
    %46 = vector.extract_strided_slice %9 {offsets = [0, 64], sizes = [2, 32], strides = [1, 1]} : vector<2x96xf32> to vector<2x32xf32>
    %47 = arith.mulf %36, %46 : vector<2x32xf32>
    %48 = arith.addf %45, %47 : vector<2x32xf32>
    %49 = math.tanh %48 : vector<2x32xf32>
    %cst_13 = arith.constant 1.000000e+00 : f32
    %50 = vector.broadcast %cst_13 : f32 to vector<2x32xf32>
    %51 = arith.subf %50, %44 : vector<2x32xf32>
    %52 = arith.mulf %51, %49 : vector<2x32xf32>
    %53 = arith.mulf %44, %1 : vector<2x32xf32>
    %54 = arith.addf %52, %53 : vector<2x32xf32>
    %55 = tpu.concatenate %54, %19, %28 in 1 : vector<2x32xf32>, vector<2x50xf32>, vector<2x8xf32> -> vector<2x90xf32>
    %c0_14 = arith.constant 0 : index
    %c0_15 = arith.constant 0 : index
    %56 = vector.load %arg3[%c0_14, %c0_15] : memref<90x128xf32, #tpu.memory_space<vmem>>, vector<90x128xf32>
    %cst_16 = arith.constant dense<0.000000e+00> : vector<2x128xf32>
    %57 = tpu.matmul %55, %56, %cst_16 {dimension_numbers = #tpu.dot_dimension_numbers<[1], [0], [0], [1], [0, 0, 1, 1], [], []>} : vector<2x90xf32>, vector<90x128xf32>, vector<2x128xf32> -> vector<2x128xf32>
    %c1 = arith.constant 1 : index
    %c0_17 = arith.constant 0 : index
    %58 = vector.load %arg4[%c1, %c0_17] : memref<8x384xf32, #tpu.memory_space<vmem>>, vector<1x128xf32>
    %59 = vector.broadcast %58 : vector<1x128xf32> to vector<2x128xf32>
    %60 = arith.addf %57, %59 : vector<2x128xf32>
    %61 = vector.extract_strided_slice %60 {offsets = [0, 0], sizes = [2, 51], strides = [1, 1]} : vector<2x128xf32> to vector<2x51xf32>
    %62 = vector.extract_strided_slice %60 {offsets = [0, 51], sizes = [2, 8], strides = [1, 1]} : vector<2x128xf32> to vector<2x8xf32>
    %63 = vector.extract_strided_slice %60 {offsets = [0, 59], sizes = [2, 8], strides = [1, 1]} : vector<2x128xf32> to vector<2x8xf32>
    %64 = arith.negf %63 : vector<2x8xf32>
    %65 = math.exp %64 : vector<2x8xf32>
    %cst_18 = arith.constant 1.000000e+00 : f32
    %66 = vector.broadcast %cst_18 : f32 to vector<2x8xf32>
    %67 = arith.addf %66, %65 : vector<2x8xf32>
    %68 = arith.divf %66, %67 : vector<2x8xf32>
    %cst_19 = arith.constant 9.99999974E-6 : f32
    %69 = vector.broadcast %cst_19 : f32 to vector<2x8xf32>
    %70 = arith.addf %68, %69 : vector<2x8xf32>
    %71 = vector.extract_strided_slice %61 {offsets = [0, 0], sizes = [2, 17], strides = [1, 1]} : vector<2x51xf32> to vector<2x17xf32>
    %72 = vector.extract_strided_slice %10 {offsets = [0, 0], sizes = [2, 17], strides = [1, 1]} : vector<2x51xf32> to vector<2x17xf32>
    %73 = arith.addf %71, %72 : vector<2x17xf32>
    %74 = arith.negf %73 : vector<2x17xf32>
    %75 = math.exp %74 : vector<2x17xf32>
    %cst_20 = arith.constant 1.000000e+00 : f32
    %76 = vector.broadcast %cst_20 : f32 to vector<2x17xf32>
    %77 = arith.addf %76, %75 : vector<2x17xf32>
    %78 = arith.divf %76, %77 : vector<2x17xf32>
    %79 = vector.extract_strided_slice %61 {offsets = [0, 17], sizes = [2, 17], strides = [1, 1]} : vector<2x51xf32> to vector<2x17xf32>
    %80 = vector.extract_strided_slice %10 {offsets = [0, 17], sizes = [2, 17], strides = [1, 1]} : vector<2x51xf32> to vector<2x17xf32>
    %81 = arith.addf %79, %80 : vector<2x17xf32>
    %82 = arith.negf %81 : vector<2x17xf32>
    %83 = math.exp %82 : vector<2x17xf32>
    %cst_21 = arith.constant 1.000000e+00 : f32
    %84 = vector.broadcast %cst_21 : f32 to vector<2x17xf32>
    %85 = arith.addf %84, %83 : vector<2x17xf32>
    %86 = arith.divf %84, %85 : vector<2x17xf32>
    %87 = vector.extract_strided_slice %61 {offsets = [0, 34], sizes = [2, 17], strides = [1, 1]} : vector<2x51xf32> to vector<2x17xf32>
    %88 = vector.extract_strided_slice %10 {offsets = [0, 34], sizes = [2, 17], strides = [1, 1]} : vector<2x51xf32> to vector<2x17xf32>
    %89 = arith.mulf %78, %88 : vector<2x17xf32>
    %90 = arith.addf %87, %89 : vector<2x17xf32>
    %91 = math.tanh %90 : vector<2x17xf32>
    %cst_22 = arith.constant 1.000000e+00 : f32
    %92 = vector.broadcast %cst_22 : f32 to vector<2x17xf32>
    %93 = arith.subf %92, %86 : vector<2x17xf32>
    %94 = arith.mulf %93, %91 : vector<2x17xf32>
    %95 = arith.mulf %86, %2 : vector<2x17xf32>
    %96 = arith.addf %94, %95 : vector<2x17xf32>
    %cst_23 = arith.constant 0.000000e+00 : f32
    %97 = vector.broadcast %cst_23 : f32 to vector<2x17xf32>
    %98 = arith.cmpf ogt, %96, %97 : vector<2x17xf32>
    %cst_24 = arith.constant 0.000000e+00 : f32
    %99 = vector.broadcast %cst_24 : f32 to vector<2x17xf32>
    %100 = arith.minimumf %96, %99 : vector<2x17xf32>
    %101 = math.exp %100 : vector<2x17xf32>
    %cst_25 = arith.constant 1.000000e+00 : f32
    %102 = vector.broadcast %cst_25 : f32 to vector<2x17xf32>
    %103 = arith.subf %101, %102 : vector<2x17xf32>
    %104 = arith.select %98, %96, %103 : vector<2x17xi1>, vector<2x17xf32>
    %c0_26 = arith.constant 0 : index
    %c0_27 = arith.constant 0 : index
    %105 = vector.load %arg5[%c0_26, %c0_27] : memref<17x1xf32, #tpu.memory_space<vmem>>, vector<17x1xf32>
    %cst_28 = arith.constant dense<0.000000e+00> : vector<2x1xf32>
    %106 = tpu.matmul %104, %105, %cst_28 {dimension_numbers = #tpu.dot_dimension_numbers<[1], [0], [0], [1], [0, 0, 1, 1], [], []>} : vector<2x17xf32>, vector<17x1xf32>, vector<2x1xf32> -> vector<2x1xf32>
    %c2 = arith.constant 2 : index
    %c0_29 = arith.constant 0 : index
    %107 = vector.load %arg4[%c2, %c0_29] : memref<8x384xf32, #tpu.memory_space<vmem>>, vector<1x1xf32>
    %108 = vector.broadcast %107 : vector<1x1xf32> to vector<2x1xf32>
    %109 = arith.addf %106, %108 : vector<2x1xf32>
    %110 = math.exp %109 : vector<2x1xf32>
    %cst_30 = arith.constant 0.000000e+00 : f32
    %111 = vector.broadcast %cst_30 : f32 to vector<2x1xf32>
    %112 = arith.subf %111, %110 : vector<2x1xf32>
    %c0_31 = arith.constant 0 : index
    %c0_32 = arith.constant 0 : index
    %113 = vector.load %arg6[%c0_31, %c0_32] : memref<2x128xf32, #tpu.memory_space<vmem>>, vector<2x8xf32>
    tpu.vector_store %arg6[%c0_31, %c0_32], %62 {strides = array<i32>} : memref<2x128xf32, #tpu.memory_space<vmem>>, vector<2x8xf32>,
    %c0_33 = arith.constant 0 : index
    %c8 = arith.constant 8 : index
    %114 = vector.load %arg6[%c0_33, %c8] : memref<2x128xf32, #tpu.memory_space<vmem>>, vector<2x8xf32>
    tpu.vector_store %arg6[%c0_33, %c8], %70 {strides = array<i32>} : memref<2x128xf32, #tpu.memory_space<vmem>>, vector<2x8xf32>,
    %c0_34 = arith.constant 0 : index
    %c16 = arith.constant 16 : index
    %115 = vector.load %arg6[%c0_34, %c16] : memref<2x128xf32, #tpu.memory_space<vmem>>, vector<2x32xf32>
    tpu.vector_store %arg6[%c0_34, %c16], %54 {strides = array<i32>} : memref<2x128xf32, #tpu.memory_space<vmem>>, vector<2x32xf32>,
    %c0_35 = arith.constant 0 : index
    %c48 = arith.constant 48 : index
    %116 = vector.load %arg6[%c0_35, %c48] : memref<2x128xf32, #tpu.memory_space<vmem>>, vector<2x17xf32>
    tpu.vector_store %arg6[%c0_35, %c48], %96 {strides = array<i32>} : memref<2x128xf32, #tpu.memory_space<vmem>>, vector<2x17xf32>,
    %c0_36 = arith.constant 0 : index
    %c65 = arith.constant 65 : index
    %117 = vector.load %arg6[%c0_36, %c65] : memref<2x128xf32, #tpu.memory_space<vmem>>, vector<2x1xf32>
    tpu.vector_store %arg6[%c0_36, %c65], %109 {strides = array<i32>} : memref<2x128xf32, #tpu.memory_space<vmem>>, vector<2x1xf32>,
    %c0_37 = arith.constant 0 : index
    %c66 = arith.constant 66 : index
    %118 = vector.load %arg6[%c0_37, %c66] : memref<2x128xf32, #tpu.memory_space<vmem>>, vector<2x1xf32>
    tpu.vector_store %arg6[%c0_37, %c66], %112 {strides = array<i32>} : memref<2x128xf32, #tpu.memory_space<vmem>>, vector<2x1xf32>,
    return
  }
  func.func @transform_0(%arg0: i32) -> (i32, i32) {
    %c0_i32 = arith.constant 0 : i32
    %c0_i32_0 = arith.constant 0 : i32
    return %arg0, %c0_i32 : i32, i32
  }
  func.func @transform_1(%arg0: i32) -> (i32, i32) {
    %c0_i32 = arith.constant 0 : i32
    %c0_i32_0 = arith.constant 0 : i32
    %c0_i32_1 = arith.constant 0 : i32
    return %c0_i32, %c0_i32_0 : i32, i32
  }
  func.func @transform_2(%arg0: i32) -> (i32, i32) {
    %c0_i32 = arith.constant 0 : i32
    %c0_i32_0 = arith.constant 0 : i32
    %c0_i32_1 = arith.constant 0 : i32
    return %c0_i32, %c0_i32_0 : i32, i32
  }
  func.func @transform_3(%arg0: i32) -> (i32, i32) {
    %c0_i32 = arith.constant 0 : i32
    %c0_i32_0 = arith.constant 0 : i32
    %c0_i32_1 = arith.constant 0 : i32
    return %c0_i32, %c0_i32_0 : i32, i32
  }
  func.func @transform_4(%arg0: i32) -> (i32, i32) {
    %c0_i32 = arith.constant 0 : i32
    %c0_i32_0 = arith.constant 0 : i32
    %c0_i32_1 = arith.constant 0 : i32
    return %c0_i32, %c0_i32_0 : i32, i32
  }
  func.func @transform_5(%arg0: i32) -> (i32, i32) {
    %c0_i32 = arith.constant 0 : i32
    %c0_i32_0 = arith.constant 0 : i32
    return %arg0, %c0_i32 : i32, i32
  }
}

</mosaic_0001>

<llo_original>
// kernel: tpu_custom_call.1
$region0: #{tpu_custom_call.1}
  #allocation0 [shape = 'u32[]', space=smem, size = 0x4, offset = 0x4, fixed_abs, tag = 'smem constant byte address 0x4 - core index']
  #allocation1 [shape = 'u32[144,128]{1,0:T(1,128)}', space=vmem, size = 0x12000, scoped, tag = 'internal scratch']
  %s0 = inlined_call_operand.vmem [shape: f32[2,128], index: 0, kind: input, shape index: {}]
  %s1 = inlined_call_operand.hbm [shape: f32[128,384], index: 1, kind: input, shape index: {}]
  %s2 = inlined_call_operand.hbm [shape: f32[90,128], index: 2, kind: input, shape index: {}]
  %s3 = inlined_call_operand.vmem [shape: f32[8,384], index: 3, kind: input, shape index: {}]
  %s4 = inlined_call_operand.vmem [shape: f32[17,1], index: 4, kind: input, shape index: {}]
  %s5 = inlined_call_operand.hbm [shape: f32[2,128], index: 5, kind: output, shape index: {}]
  %s6 = sld [smem:[#allocation0]]
  $region38: #{tpu_custom_call.1} parent=0
    _
  %s8 = ssub.s32 1, %s6
  %s9 = scalar_select 0, %s8, %s6
  $region1: #{tpu_custom_call.1} parent=0
    #allocation2 [shape = 'u8[196608]{0}', space=vmem, size = 0x30000, scoped, tag = 'input window, operand 1, single buffered']
    #allocation3 [shape = 's32[1]{0}', space=sflag, size = 0x4, scoped, tag = 'scoped memory for tpu_custom_call.1']
    #allocation4 [shape = 's32[1]{0}', space=sflag, size = 0x4, scoped, tag = 'scoped memory for tpu_custom_call.1']
    #allocation5 [shape = 'u8[49152]{0}', space=vmem, size = 0xc000, scoped, tag = 'input window, operand 2, single buffered']
    #allocation6 [shape = 's32[1]{0}', space=sflag, size = 0x4, scoped, tag = 'scoped memory for tpu_custom_call.1']
    #allocation7 [shape = 'u8[1024]{0}', space=vmem, size = 0x400, scoped, tag = 'output window, operand 0, single buffered']
    %10 = vsyncpa [#allocation3], 0
    %11 = vsyncpa [#allocation6], 0
    %12 = vsyncpa [#allocation4], 0
    // Predicated region
    $region2: #{tpu_custom_call.1} parent=1 // pred_check
      _
    $region3: #{tpu_custom_call.1} parent=1 // pred_check_branch
      %14 = sbr.rel (0) target = $region5
    $region4: #{tpu_custom_call.1} parent=1 // pred_region
      _
    $region5: #{tpu_custom_call.1} parent=1 // pred_fallthru
      _
    // Predicated region
    $region6: #{tpu_custom_call.1} parent=1 // pred_check
      _
    $region7: #{tpu_custom_call.1} parent=1 // pred_check_branch
      %16 = sbr.rel (0) target = $region9
    $region8: #{tpu_custom_call.1} parent=1 // pred_region
      %s18 = ssub.s32 6144, 6144
      %19 = vsyncadd [#allocation3], %s18
      %s20 = sshll.u32 [#allocation2], 4
      %s21 = int_to_ptr.vmem [resolvable:$true] %s20
      %26 = dma.hbm_to_vmem [thread:$0]  %s1, 6144, %s21, [#allocation3], 384, 384, 24
    $region9: #{tpu_custom_call.1} parent=1 // pred_fallthru
      _
    // Predicated region
    $region10: #{tpu_custom_call.1} parent=1 // pred_check
      _
    $region11: #{tpu_custom_call.1} parent=1 // pred_check_branch
      %28 = sbr.rel (0) target = $region13
    $region12: #{tpu_custom_call.1} parent=1 // pred_region
      %s30 = ssub.s32 1536, 1536
      %31 = vsyncadd [#allocation6], %s30
      %s32 = sshll.u32 [#allocation5], 4
      %s33 = int_to_ptr.vmem [resolvable:$true] %s32
      %38 = dma.hbm_to_vmem [thread:$0]  %s2, 1536, %s33, [#allocation6], 128, 128, 8
    $region13: #{tpu_custom_call.1} parent=1 // pred_fallthru
      _
    // Predicated region
    $region14: #{tpu_custom_call.1} parent=1 // pred_check
      _
    $region15: #{tpu_custom_call.1} parent=1 // pred_check_branch
      %40 = sbr.rel (0) target = $region17
    $region16: #{tpu_custom_call.1} parent=1 // pred_region
      _
    $region17: #{tpu_custom_call.1} parent=1 // pred_fallthru
      _
    // Predicated region
    $region18: #{tpu_custom_call.1} parent=1 // pred_check
      _
    $region19: #{tpu_custom_call.1} parent=1 // pred_check_branch
      %42 = sbr.rel (0) target = $region21
    $region20: #{tpu_custom_call.1} parent=1 // pred_region
      _
    $region21: #{tpu_custom_call.1} parent=1 // pred_fallthru
      _
    // Predicated region
    $region22: #{tpu_custom_call.1} parent=1 // pred_check
      _
    $region23: #{tpu_custom_call.1} parent=1 // pred_check_branch
      %44 = sbr.rel (0) target = $region25
    $region24: #{tpu_custom_call.1} parent=1 // pred_region
      %45 = dma.done [#allocation3], 6144
    $region25: #{tpu_custom_call.1} parent=1 // pred_fallthru
      _
    // Predicated region
    $region26: #{tpu_custom_call.1} parent=1 // pred_check
      _
    $region27: #{tpu_custom_call.1} parent=1 // pred_check_branch
      %47 = sbr.rel (0) target = $region29
    $region28: #{tpu_custom_call.1} parent=1 // pred_region
      %48 = dma.done [#allocation6], 1536
    $region29: #{tpu_custom_call.1} parent=1 // pred_fallthru
      _
    %v49 = vld [vmem:[%s0] sm:$0x3]
    %v50 = vld [vmem:[#allocation2] sm:$0xff]
    %v51 = vld [vmem:[#allocation2 + $0x8] sm:$0xff]
    %v52 = vld [vmem:[#allocation2 + $0x10] sm:$0xff]
    %v53 = vld [vmem:[#allocation2 + $0x18] sm:$0xff]
    %v54 = vld [vmem:[#allocation2 + $0x20] sm:$0xff]
    %v55 = vld [vmem:[#allocation2 + $0x28] sm:$0xff]
    %v56 = vld [vmem:[#allocation2 + $0x30] sm:$0xff]
    %v57 = vld [vmem:[#allocation2 + $0x38] sm:$0xff]
    %v58 = vld [vmem:[#allocation2 + $0x40] sm:$0xff]
    %v59 = vld [vmem:[#allocation2 + $0x48] sm:$0xff]
    %v60 = vld [vmem:[#allocation2 + $0x50] sm:$0xff]
    %v61 = vld [vmem:[#allocation2 + $0x58] sm:$0xff]
    %v62 = vld [vmem:[#allocation2 + $0x60] sm:$0xff]
    %v63 = vld [vmem:[#allocation2 + $0x68] sm:$0xff]
    %v64 = vld [vmem:[#allocation2 + $0x70] sm:$0xff]
    %v65 = vld [vmem:[#allocation2 + $0x78] sm:$0xff]
    %v66 = vld [vmem:[#allocation2 + $0x80] sm:$0xff]
    %v67 = vld [vmem:[#allocation2 + $0x88] sm:$0xff]
    %v68 = vld [vmem:[#allocation2 + $0x90] sm:$0xff]
    %v69 = vld [vmem:[#allocation2 + $0x98] sm:$0xff]
    %v70 = vld [vmem:[#allocation2 + $0xa0] sm:$0xff]
    %v71 = vld [vmem:[#allocation2 + $0xa8] sm:$0xff]
    %v72 = vld [vmem:[#allocation2 + $0xb0] sm:$0xff]
    %v73 = vld [vmem:[#allocation2 + $0xb8] sm:$0xff]
    %v74 = vld [vmem:[#allocation2 + $0xc0] sm:$0xff]
    %v75 = vld [vmem:[#allocation2 + $0xc8] sm:$0xff]
    %v76 = vld [vmem:[#allocation2 + $0xd0] sm:$0xff]
    %v77 = vld [vmem:[#allocation2 + $0xd8] sm:$0xff]
    %v78 = vld [vmem:[#allocation2 + $0xe0] sm:$0xff]
    %v79 = vld [vmem:[#allocation2 + $0xe8] sm:$0xff]
    %v80 = vld [vmem:[#allocation2 + $0xf0] sm:$0xff]
    %v81 = vld [vmem:[#allocation2 + $0xf8] sm:$0xff]
    %v82 = vld [vmem:[#allocation2 + $0x100] sm:$0xff]
    %v83 = vld [vmem:[#allocation2 + $0x108] sm:$0xff]
    %v84 = vld [vmem:[#allocation2 + $0x110] sm:$0xff]
    %v85 = vld [vmem:[#allocation2 + $0x118] sm:$0xff]
    %v86 = vld [vmem:[#allocation2 + $0x120] sm:$0xff]
    %v87 = vld [vmem:[#allocation2 + $0x128] sm:$0xff]
    %v88 = vld [vmem:[#allocation2 + $0x130] sm:$0xff]
    %v89 = vld [vmem:[#allocation2 + $0x138] sm:$0xff]
    %v90 = vld [vmem:[#allocation2 + $0x140] sm:$0xff]
    %v91 = vld [vmem:[#allocation2 + $0x148] sm:$0xff]
    %v92 = vld [vmem:[#allocation2 + $0x150] sm:$0xff]
    %v93 = vld [vmem:[#allocation2 + $0x158] sm:$0xff]
    %v94 = vld [vmem:[#allocation2 + $0x160] sm:$0xff]
    %v95 = vld [vmem:[#allocation2 + $0x168] sm:$0xff]
    %v96 = vld [vmem:[#allocation2 + $0x170] sm:$0xff]
    %v97 = vld [vmem:[#allocation2 + $0x178] sm:$0xff]
    %v98 = vld [vmem:[%s3] ss:$8 sm:$0x7]
    %v100 = vlaneseq
    %v101 = vshrl.u32 %v100, 7
    %v102 = vsub.s32 0, %v101
    %v103 = vrot.slane %v98, %v102
    %v104 = vlaneseq
    %v105 = vshrl.u32 %v104, 7
    %v106 = vsub.s32 1, %v105
    %v107 = vrot.slane %v98, %v106
    %v108 = vlaneseq
    %v109 = vshrl.u32 %v108, 7
    %v110 = vsub.s32 2, %v109
    %v111 = vrot.slane %v98, %v110
    %115 = vmatprep.subr.mxu0 %v96
    %116 = vmatpush1.msra.mxu0 %v95
    %117 = vmatprep.subr.mxu0 %v93
    %118 = vmatpush1.msra.mxu0 %v92
    %119 = vmatprep.subr.mxu0 %v90
    %120 = vmatpush1.msra.mxu0 %v89
    %121 = vmatprep.subr.mxu0 %v87
    %122 = vmatpush1.msra.mxu0 %v86
    %123 = vmatprep.subr.mxu0 %v84
    %124 = vmatpush1.msra.mxu0 %v83
    %125 = vmatprep.subr.mxu0 %v81
    %126 = vmatpush1.msra.mxu0 %v80
    %127 = vmatprep.subr.mxu0 %v78
    %128 = vmatpush1.msra.mxu0 %v77
    %129 = vmatprep.subr.mxu0 %v75
    %130 = vmatpush1.msra.mxu0 %v74
    %131 = vmatprep.subr.mxu0 %v72
    %132 = vmatpush1.msra.mxu0 %v71
    %133 = vmatprep.subr.mxu0 %v69
    %134 = vmatpush1.msra.mxu0 %v68
    %135 = vmatprep.subr.mxu0 %v66
    %136 = vmatpush1.msra.mxu0 %v65
    %137 = vmatprep.subr.mxu0 %v63
    %138 = vmatpush1.msra.mxu0 %v62
    %139 = vmatprep.subr.mxu0 %v60
    %140 = vmatpush1.msra.mxu0 %v59
    %141 = vmatprep.subr.mxu0 %v57
    %142 = vmatpush1.msra.mxu0 %v56
    %143 = vmatprep.subr.mxu0 %v54
    %144 = vmatpush1.msra.mxu0 %v53
    %145 = vmatprep.subr.mxu0 %v51
    %146 = vmatpush1.msra.mxu0 %v50
    %147 = vmatprep.subr.mxu0 0.0
    %148 = vmatpush2.msra.mxu0 0.0
    %149 = vmatprep.subr.mxu0 0.0
    %150 = vmatpush2.msra.mxu0 0.0
    %151 = vmatprep.subr.mxu0 0.0
    %152 = vmatpush2.msra.mxu0 0.0
    %153 = vmatprep.subr.mxu0 0.0
    %154 = vmatpush2.msra.mxu0 0.0
    %155 = vmatprep.subr.mxu0 0.0
    %156 = vmatpush2.msra.mxu0 0.0
    %157 = vmatprep.subr.mxu0 0.0
    %158 = vmatpush2.msra.mxu0 0.0
    %159 = vmatprep.subr.mxu0 0.0
    %160 = vmatpush2.msra.mxu0 0.0
    %161 = vmatprep.subr.mxu0 0.0
    %162 = vmatpush2.msra.mxu0 0.0
    %163 = vmatprep.subr.mxu0 0.0
    %164 = vmatpush2.msra.mxu0 0.0
    %165 = vmatprep.subr.mxu0 0.0
    %166 = vmatpush2.msra.mxu0 0.0
    %167 = vmatprep.subr.mxu0 0.0
    %168 = vmatpush2.msra.mxu0 0.0
    %169 = vmatprep.subr.mxu0 0.0
    %170 = vmatpush2.msra.mxu0 0.0
    %171 = vmatprep.subr.mxu0 0.0
    %172 = vmatpush2.msra.mxu0 0.0
    %173 = vmatprep.subr.mxu0 0.0
    %174 = vmatpush2.msra.mxu0 0.0
    %175 = vmatprep.subr.mxu0 0.0
    %176 = vmatpush2.msra.mxu0 0.0
    %177 = vmatprep.subr.mxu0 0.0
    %178 = vmatpush2.msra.mxu0 0.0
    %179 = vmatprep.mubr.f32.mxu0 0.0
    %180 = vmatmul.mubr.f32.gmra.mxu0 %v49
    %v181 = vpop.f32.mrf.mxu0
    %v182 = vadd.f32 %v103, %v181
    %v183 = vpop.f32.mrf.mxu0
    %v184 = vadd.f32 %v107, %v183
    %185 = vdwg.mxu0
    %186 = vmatprep.subr.mxu0 0.0
    %187 = vmatpush1.msra.mxu0 %v97
    %188 = vmatprep.subr.mxu0 0.0
    %189 = vmatpush1.msra.mxu0 %v94
    %190 = vmatprep.subr.mxu0 0.0
    %191 = vmatpush1.msra.mxu0 %v91
    %192 = vmatprep.subr.mxu0 0.0
    %193 = vmatpush1.msra.mxu0 %v88
    %194 = vmatprep.subr.mxu0 0.0
    %195 = vmatpush1.msra.mxu0 %v85
    %196 = vmatprep.subr.mxu0 0.0
    %197 = vmatpush1.msra.mxu0 %v82
    %198 = vmatprep.subr.mxu0 0.0
    %199 = vmatpush1.msra.mxu0 %v79
    %200 = vmatprep.subr.mxu0 0.0
    %201 = vmatpush1.msra.mxu0 %v76
    %202 = vmatprep.subr.mxu0 0.0
    %203 = vmatpush1.msra.mxu0 %v73
    %204 = vmatprep.subr.mxu0 0.0
    %205 = vmatpush1.msra.mxu0 %v70
    %206 = vmatprep.subr.mxu0 0.0
    %207 = vmatpush1.msra.mxu0 %v67
    %208 = vmatprep.subr.mxu0 0.0
    %209 = vmatpush1.msra.mxu0 %v64
    %210 = vmatprep.subr.mxu0 0.0
    %211 = vmatpush1.msra.mxu0 %v61
    %212 = vmatprep.subr.mxu0 0.0
    %213 = vmatpush1.msra.mxu0 %v58
    %214 = vmatprep.subr.mxu0 0.0
    %215 = vmatpush1.msra.mxu0 %v55
    %216 = vmatprep.subr.mxu0 0.0
    %217 = vmatpush1.msra.mxu0 %v52
    %218 = vmatprep.subr.mxu0 0.0
    %219 = vmatpush2.msra.mxu0 0.0
    %220 = vmatprep.subr.mxu0 0.0
    %221 = vmatpush2.msra.mxu0 0.0
    %222 = vmatprep.subr.mxu0 0.0
    %223 = vmatpush2.msra.mxu0 0.0
    %224 = vmatprep.subr.mxu0 0.0
    %225 = vmatpush2.msra.mxu0 0.0
    %226 = vmatprep.subr.mxu0 0.0
    %227 = vmatpush2.msra.mxu0 0.0
    %228 = vmatprep.subr.mxu0 0.0
    %229 = vmatpush2.msra.mxu0 0.0
    %230 = vmatprep.subr.mxu0 0.0
    %231 = vmatpush2.msra.mxu0 0.0
    %232 = vmatprep.subr.mxu0 0.0
    %233 = vmatpush2.msra.mxu0 0.0
    %234 = vmatprep.subr.mxu0 0.0
    %235 = vmatpush2.msra.mxu0 0.0
    %236 = vmatprep.subr.mxu0 0.0
    %237 = vmatpush2.msra.mxu0 0.0
    %238 = vmatprep.subr.mxu0 0.0
    %239 = vmatpush2.msra.mxu0 0.0
    %240 = vmatprep.subr.mxu0 0.0
    %241 = vmatpush2.msra.mxu0 0.0
    %242 = vmatprep.subr.mxu0 0.0
    %243 = vmatpush2.msra.mxu0 0.0
    %244 = vmatprep.subr.mxu0 0.0
    %245 = vmatpush2.msra.mxu0 0.0
    %246 = vmatprep.subr.mxu0 0.0
    %247 = vmatpush2.msra.mxu0 0.0
    %248 = vmatprep.subr.mxu0 0.0
    %249 = vmatpush2.msra.mxu0 0.0
    %250 = vmatprep.mubr.f32.mxu0 0.0
    %251 = vmatmul.mubr.f32.gmra.mxu0 %v49
    %v252 = vpop.f32.mrf.mxu0
    %v253 = vadd.f32 %v111, %v252
    %v254 = vpop.f32.mrf.mxu0
    %255 = vdwg.mxu0
    %vm256 = vcmp.gt.f32.partialorder %v184, 0.0
    %vm257 = vcmp.gt.f32.partialorder %v253, 0.0
    %v258 = vmin.f32 %v184, 0.0
    %v259 = vmin.f32 %v253, 0.0
    %v260 = vmul.f32 %v258, 1.442695
    %v261 = vpow.pop %v260
    %v262 = vmul.f32 %v259, 1.442695
    %v263 = vpow.pop %v262
    %v264 = vsub.f32 %v261, 1.0
    %v265 = vsub.f32 %v263, 1.0
    %v266 = vsel %vm256, %v184, %v264
    %v267 = vsel %vm257, %v253, %v265
    %269 = vrot.lane.b32.xlu0 %v182, 32
    %v270 = vpop.permute.xlu0 %269
    %v272 = vadd.f32 %v182, %v270
    %v273 = vxor.u32 %v272, 2147483648
    %v274 = vmul.f32 %v273, 1.442695
    %v275 = vpow.pop %v274
    %v276 = vadd.f32 %v275, 1.0
    %v277 = vrcp.pop %v276
    %v278 = vmul.f32 1.0, %v277
    %280 = vrot.lane.b32.xlu0 %v184, 32
    %v281 = vpop.permute.xlu0 %280
    %v283 = vadd.f32 %v182, %v281
    %v284 = vxor.u32 %v283, 2147483648
    %v285 = vmul.f32 %v284, 1.442695
    %v286 = vpow.pop %v285
    %v287 = vadd.f32 %v286, 1.0
    %v288 = vrcp.pop %v287
    %v289 = vmul.f32 1.0, %v288
    %290 = vrot.lane.b32.xlu0 %v184, 96
    %v291 = vpop.permute.xlu0 %290
    %v293 = vmul.f32 %v278, %v291
    %295 = vrot.lane.b32.xlu0 %v293, 64
    %v296 = vpop.permute.xlu0 %295
    %v298 = vadd.f32 %v182, %v296
    %v299 = vtanh.pop %v298
    %v300 = vsub.f32 1.0, %v289
    %302 = vrot.lane.b32.xlu0 %v299, 96
    %v303 = vpop.permute.xlu0 %302
    %v305 = vmul.f32 %v300, %v303
    %307 = vrot.lane.b32.xlu0 %v49, 19
    %v308 = vpop.permute.xlu0 %307
    %v310 = vmul.f32 %v289, %v308
    %v311 = vadd.f32 %v305, %v310
    %313 = vrot.lane.b32.xlu0 %v311, 96
    %v314 = vpop.permute.xlu0 %313
    %318 = vrot.lane.b32.xlu0 %v266, 45
    %v319 = vpop.permute.xlu0 %318
    %320 = vrot.lane.b32.xlu0 %v267, 45
    %v321 = vpop.permute.xlu0 %320
    %vm322 = vcmask 367616
    %v323 = vsel %vm322, %v319, %v321
    %vm326 = vcmask 261120
    %v327 = vsel %vm326, %v314, %v323
    %vm328 = vcmask 670720
    %v329 = vsel %vm328, %v327, %v321
    %v330 = vld [vmem:[#allocation5] sm:$0xff]
    %v331 = vld [vmem:[#allocation5 + $0x8] sm:$0xff]
    %v332 = vld [vmem:[#allocation5 + $0x10] sm:$0xff]
    %v333 = vld [vmem:[#allocation5 + $0x18] sm:$0xff]
    %v334 = vld [vmem:[#allocation5 + $0x20] sm:$0xff]
    %v335 = vld [vmem:[#allocation5 + $0x28] sm:$0xff]
    %v336 = vld [vmem:[#allocation5 + $0x30] sm:$0xff]
    %v337 = vld [vmem:[#allocation5 + $0x38] sm:$0xff]
    %v338 = vld [vmem:[#allocation5 + $0x40] sm:$0xff]
    %v339 = vld [vmem:[#allocation5 + $0x48] sm:$0xff]
    %v340 = vld [vmem:[#allocation5 + $0x50] sm:$0xff]
    %v341 = vld [vmem:[#allocation5 + $0x58] sm:$0x3]
    %v342 = vld [vmem:[%s3 + $0x1] ss:$0 sm:$0xff]
    %vm343 = vcmask 736256
    %v345 = vsel %vm343, %v329, 0
    %vm347 = vcmask 1041408
    %v349 = vsel %vm347, %v341, 0
    %351 = vmatprep.subr.mxu0 0.0
    %352 = vmatpush1.msra.mxu0 0.0
    %353 = vmatprep.subr.mxu0 0.0
    %354 = vmatpush1.msra.mxu0 0.0
    %355 = vmatprep.subr.mxu0 0.0
    %356 = vmatpush1.msra.mxu0 0.0
    %357 = vmatprep.subr.mxu0 0.0
    %358 = vmatpush1.msra.mxu0 0.0
    %359 = vmatprep.subr.mxu0 0.0
    %360 = vmatpush1.msra.mxu0 %v349
    %361 = vmatprep.subr.mxu0 0.0
    %362 = vmatpush1.msra.mxu0 %v340
    %363 = vmatprep.subr.mxu0 0.0
    %364 = vmatpush1.msra.mxu0 %v339
    %365 = vmatprep.subr.mxu0 0.0
    %366 = vmatpush1.msra.mxu0 %v338
    %367 = vmatprep.subr.mxu0 0.0
    %368 = vmatpush1.msra.mxu0 %v337
    %369 = vmatprep.subr.mxu0 0.0
    %370 = vmatpush1.msra.mxu0 %v336
    %371 = vmatprep.subr.mxu0 0.0
    %372 = vmatpush1.msra.mxu0 %v335
    %373 = vmatprep.subr.mxu0 0.0
    %374 = vmatpush1.msra.mxu0 %v334
    %375 = vmatprep.subr.mxu0 0.0
    %376 = vmatpush1.msra.mxu0 %v333
    %377 = vmatprep.subr.mxu0 0.0
    %378 = vmatpush1.msra.mxu0 %v332
    %379 = vmatprep.subr.mxu0 0.0
    %380 = vmatpush1.msra.mxu0 %v331
    %381 = vmatprep.subr.mxu0 0.0
    %382 = vmatpush1.msra.mxu0 %v330
    %383 = vmatprep.subr.mxu0 0.0
    %384 = vmatpush2.msra.mxu0 0.0
    %385 = vmatprep.subr.mxu0 0.0
    %386 = vmatpush2.msra.mxu0 0.0
    %387 = vmatprep.subr.mxu0 0.0
    %388 = vmatpush2.msra.mxu0 0.0
    %389 = vmatprep.subr.mxu0 0.0
    %390 = vmatpush2.msra.mxu0 0.0
    %391 = vmatprep.subr.mxu0 0.0
    %392 = vmatpush2.msra.mxu0 0.0
    %393 = vmatprep.subr.mxu0 0.0
    %394 = vmatpush2.msra.mxu0 0.0
    %395 = vmatprep.subr.mxu0 0.0
    %396 = vmatpush2.msra.mxu0 0.0
    %397 = vmatprep.subr.mxu0 0.0
    %398 = vmatpush2.msra.mxu0 0.0
    %399 = vmatprep.subr.mxu0 0.0
    %400 = vmatpush2.msra.mxu0 0.0
    %401 = vmatprep.subr.mxu0 0.0
    %402 = vmatpush2.msra.mxu0 0.0
    %403 = vmatprep.subr.mxu0 0.0
    %404 = vmatpush2.msra.mxu0 0.0
    %405 = vmatprep.subr.mxu0 0.0
    %406 = vmatpush2.msra.mxu0 0.0
    %407 = vmatprep.subr.mxu0 0.0
    %408 = vmatpush2.msra.mxu0 0.0
    %409 = vmatprep.subr.mxu0 0.0
    %410 = vmatpush2.msra.mxu0 0.0
    %411 = vmatprep.subr.mxu0 0.0
    %412 = vmatpush2.msra.mxu0 0.0
    %413 = vmatprep.subr.mxu0 0.0
    %414 = vmatpush2.msra.mxu0 0.0
    %415 = vmatprep.mubr.f32.mxu0 0.0
    %416 = vmatmul.mubr.f32.gmra.mxu0 %v345
    %v417 = vpop.f32.mrf.mxu0
    %v418 = vadd.f32 %v342, %v417
    %v419 = vpop.f32.mrf.mxu0
    %420 = vdwg.mxu0
    %v421 = vxor.u32 %v418, 2147483648
    %v422 = vmul.f32 %v421, 1.442695
    %v423 = vpow.pop %v422
    %v424 = vadd.f32 %v423, 1.0
    %v425 = vrcp.pop %v424
    %v426 = vmul.f32 1.0, %v425
    %v427 = vadd.f32 %v426, 1e-05
    %428 = vrot.lane.b32.xlu0 %v184, 64
    %v429 = vpop.permute.xlu0 %428
    %v431 = vadd.f32 %v418, %v429
    %v432 = vxor.u32 %v431, 2147483648
    %v433 = vmul.f32 %v432, 1.442695
    %v434 = vpow.pop %v433
    %v435 = vadd.f32 %v434, 1.0
    %v436 = vrcp.pop %v435
    %v437 = vmul.f32 1.0, %v436
    %438 = vrot.lane.b32.xlu0 %v184, 30
    %v439 = vpop.permute.xlu0 %438
    %v441 = vmul.f32 %v437, %v439
    %443 = vrot.lane.b32.xlu0 %v441, 34
    %v444 = vpop.permute.xlu0 %443
    %v446 = vadd.f32 %v418, %v444
    %v447 = vtanh.pop %v446
    %v448 = vsub.f32 1.0, %v437
    %450 = vrot.lane.b32.xlu0 %v447, 111
    %v451 = vpop.permute.xlu0 %450
    %v453 = vmul.f32 %v448, %v451
    %454 = vrot.lane.b32.xlu0 %v49, 100
    %v455 = vpop.permute.xlu0 %454
    %v457 = vmul.f32 %v437, %v455
    %v458 = vadd.f32 %v453, %v457
    %vm459 = vcmp.gt.f32.partialorder %v458, 0.0
    %v460 = vmin.f32 %v458, 0.0
    %v461 = vmul.f32 %v460, 1.442695
    %v462 = vpow.pop %v461
    %v463 = vsub.f32 %v462, 1.0
    %v464 = vsel %vm459, %v458, %v463
    %v465 = vld [vmem:[%s4] sm:$0xff]
    %v466 = vld [vmem:[%s4 + $0x8] sm:$0xff]
    %v467 = vld [vmem:[%s4 + $0x10] sm:$0x1]
    %v468 = vld [vmem:[%s3 + $0x2] ss:$0 sm:$0xff]
    %470 = vrot.lane.b32.xlu0 %v464, 111
    %v471 = vpop.permute.xlu0 %470
    %vm472 = vcmask 138240
    %v473 = vsel %vm472, %v471, 0
    %vm475 = vcmask 1040384
    %v477 = vsel %vm475, %v467, 0
    %479 = vmatprep.subr.mxu0 0.0
    %480 = vmatpush1.msra.mxu0 0.0
    %481 = vmatprep.subr.mxu0 0.0
    %482 = vmatpush1.msra.mxu0 0.0
    %483 = vmatprep.subr.mxu0 0.0
    %484 = vmatpush1.msra.mxu0 0.0
    %485 = vmatprep.subr.mxu0 0.0
    %486 = vmatpush1.msra.mxu0 0.0
    %487 = vmatprep.subr.mxu0 0.0
    %488 = vmatpush1.msra.mxu0 0.0
    %489 = vmatprep.subr.mxu0 0.0
    %490 = vmatpush1.msra.mxu0 0.0
    %491 = vmatprep.subr.mxu0 0.0
    %492 = vmatpush1.msra.mxu0 0.0
    %493 = vmatprep.subr.mxu0 0.0
    %494 = vmatpush1.msra.mxu0 0.0
    %495 = vmatprep.subr.mxu0 0.0
    %496 = vmatpush1.msra.mxu0 0.0
    %497 = vmatprep.subr.mxu0 0.0
    %498 = vmatpush1.msra.mxu0 0.0
    %499 = vmatprep.subr.mxu0 0.0
    %500 = vmatpush1.msra.mxu0 0.0
    %501 = vmatprep.subr.mxu0 0.0
    %502 = vmatpush1.msra.mxu0 0.0
    %503 = vmatprep.subr.mxu0 0.0
    %504 = vmatpush1.msra.mxu0 0.0
    %505 = vmatprep.subr.mxu0 0.0
    %506 = vmatpush1.msra.mxu0 %v477
    %507 = vmatprep.subr.mxu0 0.0
    %508 = vmatpush1.msra.mxu0 %v466
    %509 = vmatprep.subr.mxu0 0.0
    %510 = vmatpush1.msra.mxu0 %v465
    %511 = vmatprep.subr.mxu0 0.0
    %512 = vmatpush2.msra.mxu0 0.0
    %513 = vmatprep.subr.mxu0 0.0
    %514 = vmatpush2.msra.mxu0 0.0
    %515 = vmatprep.subr.mxu0 0.0
    %516 = vmatpush2.msra.mxu0 0.0
    %517 = vmatprep.subr.mxu0 0.0
    %518 = vmatpush2.msra.mxu0 0.0
    %519 = vmatprep.subr.mxu0 0.0
    %520 = vmatpush2.msra.mxu0 0.0
    %521 = vmatprep.subr.mxu0 0.0
    %522 = vmatpush2.msra.mxu0 0.0
    %523 = vmatprep.subr.mxu0 0.0
    %524 = vmatpush2.msra.mxu0 0.0
    %525 = vmatprep.subr.mxu0 0.0
    %526 = vmatpush2.msra.mxu0 0.0
    %527 = vmatprep.subr.mxu0 0.0
    %528 = vmatpush2.msra.mxu0 0.0
    %529 = vmatprep.subr.mxu0 0.0
    %530 = vmatpush2.msra.mxu0 0.0
    %531 = vmatprep.subr.mxu0 0.0
    %532 = vmatpush2.msra.mxu0 0.0
    %533 = vmatprep.subr.mxu0 0.0
    %534 = vmatpush2.msra.mxu0 0.0
    %535 = vmatprep.subr.mxu0 0.0
    %536 = vmatpush2.msra.mxu0 0.0
    %537 = vmatprep.subr.mxu0 0.0
    %538 = vmatpush2.msra.mxu0 0.0
    %539 = vmatprep.subr.mxu0 0.0
    %540 = vmatpush2.msra.mxu0 0.0
    %541 = vmatprep.subr.mxu0 0.0
    %542 = vmatpush2.msra.mxu0 0.0
    %543 = vmatprep.mubr.f32.mxu0 0.0
    %544 = vmatmul.mubr.f32.gmra.mxu0 %v473
    %v545 = vpop.f32.mrf.mxu0
    %v546 = vadd.f32 %v468, %v545
    %v547 = vpop.f32.mrf.mxu0
    %548 = vdwg.mxu0
    %v549 = vmul.f32 %v546, 1.442695
    %v550 = vpow.pop %v549
    %v551 = vsub.f32 0.0, %v550
    %553 = vrot.lane.b32.xlu0 %v418, 77
    %v554 = vpop.permute.xlu0 %553
    %vm556 = vcmask 58368
    %557 = vst.msk [vmem:[#allocation7] sm:$0x3] %vm556, %v554
    %559 = vrot.lane.b32.xlu0 %v427, 77
    %v560 = vpop.permute.xlu0 %559
    %vm562 = vcmask 123968
    %563 = vst.msk [vmem:[#allocation7] sm:$0x3] %vm562, %v560
    %564 = vrot.lane.b32.xlu0 %v311, 112
    %v565 = vpop.permute.xlu0 %564
    %vm567 = vcmask 386176
    %568 = vst.msk [vmem:[#allocation7] sm:$0x3] %vm567, %v565
    %570 = vrot.lane.b32.xlu0 %v458, 31
    %v571 = vpop.permute.xlu0 %570
    %vm573 = vcmask 525696
    %574 = vst.msk [vmem:[#allocation7] sm:$0x3] %vm573, %v571
    %576 = vrot.lane.b32.xlu0 %v546, 65
    %v577 = vpop.permute.xlu0 %576
    %vm579 = vcmask 534024
    %580 = vst.msk [vmem:[#allocation7] sm:$0x3] %vm579, %v577
    %582 = vrot.lane.b32.xlu0 %v551, 66
    %v583 = vpop.permute.xlu0 %582
    %vm585 = vcmask 542224
    %586 = vst.msk [vmem:[#allocation7] sm:$0x3] %vm585, %v583
    // Predicated region
    $region30: #{tpu_custom_call.1} parent=1 // pred_check
      _
    $region31: #{tpu_custom_call.1} parent=1 // pred_check_branch
      %588 = sbr.rel (0) target = $region33
    $region32: #{tpu_custom_call.1} parent=1 // pred_region
      %s590 = ssub.s32 32, 32
      %591 = vsyncadd [#allocation4], %s590
      %s593 = sshll.u32 [#allocation7], 4
      %s594 = int_to_ptr.vmem [resolvable:$true] %s593
      %596 = dma.vmem_to_hbm [thread:$0]  %s594, 32, %s5, [#allocation4]
    $region33: #{tpu_custom_call.1} parent=1 // pred_fallthru
      _
    // Predicated region
    $region34: #{tpu_custom_call.1} parent=1 // pred_check
      _
    $region35: #{tpu_custom_call.1} parent=1 // pred_check_branch
      %598 = sbr.rel (0) target = $region37
    $region36: #{tpu_custom_call.1} parent=1 // pred_region
      %599 = dma.done [#allocation4], 32
    $region37: #{tpu_custom_call.1} parent=1 // pred_fallthru
      _
    %600 = vsyncpa [#allocation3], 1
    %601 = vsyncpa [#allocation6], 1
    %602 = vsyncpa [#allocation4], 1

</llo_original>
